<compile_context>
chip_gen: v6e
topology: v6e:2x2x1
jax: 0.10.0
libtpu: 0.0.40
codegen_flags: <defaults>
</compile_context>

<pallas_src>
import jax
import jax.numpy as jnp
from jax import lax
from jax.experimental import pallas as pl
from jax.experimental.pallas import tpu as pltpu

# Zachary karate-club edge list used by the reference module.
edge_list = [(1, 0), (2, 0), (2, 1), (3, 0), (3, 1), (3, 2), (4, 0), (5, 0),
             (6, 0), (6, 4), (6, 5), (7, 0), (7, 1), (7, 2), (7, 3), (8, 0),
             (8, 2), (9, 2), (10, 0), (10, 4), (10, 5), (11, 0), (12, 0),
             (12, 3), (13, 0), (13, 1), (13, 2), (13, 3), (16, 5), (16, 6),
             (17, 0), (17, 1), (19, 0), (19, 1), (21, 0), (21, 1), (25, 23),
             (25, 24), (27, 2), (27, 23), (27, 24), (28, 2), (29, 23),
             (29, 26), (30, 1), (30, 8), (31, 0), (31, 24), (31, 25),
             (31, 28), (32, 2), (32, 8), (32, 14), (32, 15), (32, 18),
             (32, 20), (32, 22), (32, 23), (32, 29), (32, 30), (32, 31),
             (33, 8), (33, 9), (33, 13), (33, 14), (33, 15), (33, 18),
             (33, 19), (33, 20), (33, 22), (33, 23), (33, 26), (33, 27),
             (33, 28), (33, 29), (33, 30), (33, 31), (33, 32)]

N_NODES = 34
IN_FEATS = 5
OUT_FEATS = 2


def gcn_kernel(adj_ref, x_ref, w_ref, o_ref):
    # 1) Node-apply linear FIRST (fewer MXU MACs than aggregating first).
    #    Contract x[:, in] with w[:, in] directly -> no wrapper transpose.
    xw = lax.dot_general(
        x_ref[...], w_ref[...],
        dimension_numbers=(((1,), (1,)), ((), ())),
        preferred_element_type=jnp.float32)           # (N, out_feats) in f32
    # 2) Message-passing sum: out = A @ (X W^T).  A is exact 0/1 in bf16;
    #    feed the MXU native bf16 operands, accumulate in f32.
    o_ref[...] = jnp.dot(adj_ref[...], xw.astype(jnp.bfloat16),
                         preferred_element_type=jnp.float32).astype(o_ref.dtype)


def gcn_forward(adj, x, w):
    """adj: (N, N) f32 0/1; x: (N, in_feats) f32; w: (out_feats, in_feats) (PyTorch Linear layout)."""
    n, f_in = x.shape
    f_out = w.shape[0]

    # bf16 operands for native-rate MXU passes; adjacency (0/1) is exact.
    adj_bf = adj.astype(jnp.bfloat16)
    x_bf = x.astype(jnp.bfloat16)
    w_bf = w.astype(jnp.bfloat16)

    return pl.pallas_call(
        gcn_kernel,
        out_shape=jax.ShapeDtypeStruct((n, f_out), jnp.float32),
        grid=(1,),
        # block shapes equal the full array dims -> single VMEM-resident tiles
        in_specs=[
            pl.BlockSpec((n, n), lambda i: (0, 0)),
            pl.BlockSpec((n, f_in), lambda i: (0, 0)),
            pl.BlockSpec((f_out, f_in), lambda i: (0, 0)),
        ],
        out_specs=pl.BlockSpec((n, f_out), lambda i: (0, 0)),
        compiler_params=pltpu.CompilerParams(
            dimension_semantics=("arbitrary",)),
    )(adj_bf, x_bf, w_bf)


def build_adjacency():
    # A[dst, src] = 1 for each (undirected) edge; symmetrized as in the
    # standard DGL karate-club graph construction (no self-loops).
    rows, cols = [], []
    for (u, v) in edge_list:
        rows += [v, u]
        cols += [u, v]
    adj = jnp.zeros((N_NODES, N_NODES), dtype=jnp.float32)
    adj = adj.at[jnp.array(rows), jnp.array(cols)].set(1.0)
    return adj


if __name__ == "__main__":
    key = jax.random.PRNGKey(0)
    k_x, k_w = jax.random.split(key)

    # Node features: (34, 5) float32.
    x = jax.random.normal(k_x, (N_NODES, IN_FEATS), dtype=jnp.float32)

    # nn.Linear(5, 2, bias=False) weight, PyTorch default init: U(-1/sqrt(in), 1/sqrt(in)).
    bound = 1.0 / (IN_FEATS ** 0.5)
    w = jax.random.uniform(k_w, (OUT_FEATS, IN_FEATS),
                           minval=-bound, maxval=bound, dtype=jnp.float32)

    adj = build_adjacency()

    out = gcn_forward(adj, x, w)
    jax.block_until_ready(out)
    assert out.shape == (N_NODES, OUT_FEATS)

    # Matched-precision reference (same bf16 rounding of operands / intermediate,
    # f32 accumulation) -> should agree tightly with the kernel.
    x_bf = x.astype(jnp.bfloat16).astype(jnp.float32)
    w_bf = w.astype(jnp.bfloat16).astype(jnp.float32)
    xw_bf = (x_bf @ w_bf.T).astype(jnp.bfloat16).astype(jnp.float32)
    ref_mixed = adj @ xw_bf
    assert jnp.allclose(out, ref_mixed, atol=1e-3, rtol=1e-3)

    # Full-precision semantic reference (A @ (X @ W^T)) -> loose tolerance
    # accounts for the bf16 operand rounding.
    ref_f32 = adj @ (x @ w.T)
    assert jnp.allclose(out, ref_f32, atol=5e-2, rtol=5e-2)

    print("KERNEL_OK")
</pallas_src>

<mosaic_0001>
module attributes {stable_mosaic.version = 11 : i64} {
  func.func @gcn_kernel(%arg0: i32, %arg1: memref<34x34xbf16, #tpu.memory_space<vmem>>, %arg2: memref<34x5xbf16, #tpu.memory_space<vmem>>, %arg3: memref<2x5xbf16, #tpu.memory_space<vmem>>, %arg4: memref<34x2xf32, #tpu.memory_space<vmem>>) attributes {dimension_semantics = [#tpu.dimension_semantics<arbitrary>], iteration_bounds = array<i64: 1>, scalar_prefetch = 0 : i64, scratch_operands = 0 : i64, tpu.core_type = #tpu.core_type<tc>, window_params = [{pipeline_mode = #tpu.pipeline_mode<synchronous>, transform_indices = @transform_0, window_bounds = array<i64: 34, 34>}, {pipeline_mode = #tpu.pipeline_mode<synchronous>, transform_indices = @transform_1, window_bounds = array<i64: 34, 5>}, {pipeline_mode = #tpu.pipeline_mode<synchronous>, transform_indices = @transform_2, window_bounds = array<i64: 2, 5>}, {pipeline_mode = #tpu.pipeline_mode<synchronous>, transform_indices = @transform_3, window_bounds = array<i64: 34, 2>}]} {
    %c0 = arith.constant 0 : index
    %c0_0 = arith.constant 0 : index
    %0 = vector.load %arg2[%c0, %c0_0] : memref<34x5xbf16, #tpu.memory_space<vmem>>, vector<34x5xbf16>
    %c0_1 = arith.constant 0 : index
    %c0_2 = arith.constant 0 : index
    %1 = vector.load %arg3[%c0_1, %c0_2] : memref<2x5xbf16, #tpu.memory_space<vmem>>, vector<2x5xbf16>
    %cst = arith.constant dense<0.000000e+00> : vector<34x2xf32>
    %2 = tpu.matmul %0, %1, %cst {dimension_numbers = #tpu.dot_dimension_numbers<[1], [1], [0], [0], [0, 0, 1, 0], [], []>} : vector<34x5xbf16>, vector<2x5xbf16>, vector<34x2xf32> -> vector<34x2xf32>
    %c0_3 = arith.constant 0 : index
    %c0_4 = arith.constant 0 : index
    %3 = vector.load %arg1[%c0_3, %c0_4] : memref<34x34xbf16, #tpu.memory_space<vmem>>, vector<34x34xbf16>
    %4 = arith.truncf %2 : vector<34x2xf32> to vector<34x2xbf16>
    %cst_5 = arith.constant dense<0.000000e+00> : vector<34x2xf32>
    %5 = tpu.matmul %3, %4, %cst_5 {dimension_numbers = #tpu.dot_dimension_numbers<[1], [0], [0], [1], [0, 0, 1, 1], [], []>} : vector<34x34xbf16>, vector<34x2xbf16>, vector<34x2xf32> -> vector<34x2xf32>
    %c0_6 = arith.constant 0 : index
    %c0_7 = arith.constant 0 : index
    %6 = vector.load %arg4[%c0_6, %c0_7] : memref<34x2xf32, #tpu.memory_space<vmem>>, vector<34x2xf32>
    tpu.vector_store %arg4[%c0_6, %c0_7], %5 {strides = array<i32>} : memref<34x2xf32, #tpu.memory_space<vmem>>, vector<34x2xf32>,
    return
  }
  func.func @transform_0(%arg0: i32) -> (i32, i32) {
    %c0_i32 = arith.constant 0 : i32
    %c0_i32_0 = arith.constant 0 : i32
    %c0_i32_1 = arith.constant 0 : i32
    return %c0_i32, %c0_i32_0 : i32, i32
  }
  func.func @transform_1(%arg0: i32) -> (i32, i32) {
    %c0_i32 = arith.constant 0 : i32
    %c0_i32_0 = arith.constant 0 : i32
    %c0_i32_1 = arith.constant 0 : i32
    return %c0_i32, %c0_i32_0 : i32, i32
  }
  func.func @transform_2(%arg0: i32) -> (i32, i32) {
    %c0_i32 = arith.constant 0 : i32
    %c0_i32_0 = arith.constant 0 : i32
    %c0_i32_1 = arith.constant 0 : i32
    return %c0_i32, %c0_i32_0 : i32, i32
  }
  func.func @transform_3(%arg0: i32) -> (i32, i32) {
    %c0_i32 = arith.constant 0 : i32
    %c0_i32_0 = arith.constant 0 : i32
    %c0_i32_1 = arith.constant 0 : i32
    return %c0_i32, %c0_i32_0 : i32, i32
  }
}

</mosaic_0001>

<llo_original>
// kernel: tpu_custom_call.1
$region0: #{tpu_custom_call.1}
  #allocation0 [shape = 'u32[]', space=smem, size = 0x4, offset = 0x4, fixed_abs, tag = 'smem constant byte address 0x4 - core index']
  #allocation1 [shape = 'u32[144,128]{1,0:T(1,128)}', space=vmem, size = 0x12000, scoped, tag = 'internal scratch']
  %s0 = inlined_call_operand.vmem [shape: bf16[34,34], index: 0, kind: input, shape index: {}]
  %s1 = inlined_call_operand.vmem [shape: bf16[34,5], index: 1, kind: input, shape index: {}]
  %s2 = inlined_call_operand.vmem [shape: bf16[2,5], index: 2, kind: input, shape index: {}]
  %s3 = inlined_call_operand.vmem [shape: f32[34,2], index: 3, kind: output, shape index: {}]
  %s4 = sld [smem:[#allocation0]]
  $region22: #{tpu_custom_call.1} parent=0
    _
  %s6 = ssub.s32 1, %s4
  %s7 = scalar_select 0, %s6, %s4
  // Predicated region
  $region2: #{tpu_custom_call.1} parent=0 // pred_check
    _
  $region3: #{tpu_custom_call.1} parent=0 // pred_check_branch
    %9 = sbr.rel (0) target = $region5
  $region4: #{tpu_custom_call.1} parent=0 // pred_region
    _
  $region5: #{tpu_custom_call.1} parent=0 // pred_fallthru
    _
  // Predicated region
  $region6: #{tpu_custom_call.1} parent=0 // pred_check
    _
  $region7: #{tpu_custom_call.1} parent=0 // pred_check_branch
    %11 = sbr.rel (0) target = $region9
  $region8: #{tpu_custom_call.1} parent=0 // pred_region
    _
  $region9: #{tpu_custom_call.1} parent=0 // pred_fallthru
    _
  // Predicated region
  $region10: #{tpu_custom_call.1} parent=0 // pred_check
    _
  $region11: #{tpu_custom_call.1} parent=0 // pred_check_branch
    %13 = sbr.rel (0) target = $region13
  $region12: #{tpu_custom_call.1} parent=0 // pred_region
    _
  $region13: #{tpu_custom_call.1} parent=0 // pred_fallthru
    _
  %v15 = vld [vmem:[%s1] sm:$0xf]
  %v16 = vld [vmem:[%s1 + $0x4] sm:$0xf]
  %v17 = vld [vmem:[%s1 + $0x8] sm:$0xf]
  %v18 = vld [vmem:[%s1 + $0xc] sm:$0xf]
  %v19 = vld [vmem:[%s1 + $0x10] sm:$0x1]
  %v20 = vld [vmem:[%s2] sm:$0x1]
  %v26 = vunpack.c.l.b16 %v15
  %v27 = vunpack.c.l.b16 %v16
  %v28 = vunpack.c.l.b16 %v17
  %v29 = vunpack.c.l.b16 %v18
  %v30 = vunpack.c.l.b16 %v19
  %v31 = vpack.c.b16 %v27, %v26
  %v32 = vpack.c.b16 %v29, %v28
  %v33 = vpack.c.b16 %v30, %v30
  %vm34 = vcmask 39936
  %v36 = vsel %vm34, %v31, 0
  %v39 = vsel %vm34, %v32, 0
  %v42 = vsel %vm34, %v33, 0
  %v45 = vsel %vm34, %v20, 0
  %47 = vmatprep.subr.bf16.mxu0 0
  %48 = vmatpush1.bf16.xpose.msra.mxu0 0
  %49 = vmatprep.subr.bf16.mxu0 0
  %50 = vmatpush1.bf16.xpose.msra.mxu0 0
  %51 = vmatprep.subr.bf16.mxu0 0
  %52 = vmatpush1.bf16.xpose.msra.mxu0 0
  %53 = vmatprep.subr.bf16.mxu0 0
  %54 = vmatpush1.bf16.xpose.msra.mxu0 0
  %55 = vmatprep.subr.bf16.mxu0 0
  %56 = vmatpush1.bf16.xpose.msra.mxu0 0
  %57 = vmatprep.subr.bf16.mxu0 0
  %58 = vmatpush1.bf16.xpose.msra.mxu0 0
  %59 = vmatprep.subr.bf16.mxu0 0
  %60 = vmatpush1.bf16.xpose.msra.mxu0 0
  %61 = vmatprep.subr.bf16.mxu0 0
  %62 = vmatpush1.bf16.xpose.msra.mxu0 %v45
  %63 = vmatprep.subr.bf16.mxu0 0
  %64 = vmatpush2.bf16.xpose.msra.mxu0 0
  %65 = vmatprep.subr.bf16.mxu0 0
  %66 = vmatpush2.bf16.xpose.msra.mxu0 0
  %67 = vmatprep.subr.bf16.mxu0 0
  %68 = vmatpush2.bf16.xpose.msra.mxu0 0
  %69 = vmatprep.subr.bf16.mxu0 0
  %70 = vmatpush2.bf16.xpose.msra.mxu0 0
  %71 = vmatprep.subr.bf16.mxu0 0
  %72 = vmatpush2.bf16.xpose.msra.mxu0 0
  %73 = vmatprep.subr.bf16.mxu0 0
  %74 = vmatpush2.bf16.xpose.msra.mxu0 0
  %75 = vmatprep.subr.bf16.mxu0 0
  %76 = vmatpush2.bf16.xpose.msra.mxu0 0
  %77 = vmatprep.subr.bf16.mxu0 0
  %78 = vmatpush2.bf16.xpose.msra.mxu0 0
  %79 = vmatprep.mubr.bf16.mxu0 0
  %80 = vmatmul.mubr.bf16.gmra.mxu0 %v36
  %v81 = vpop.f32.mrf.mxu0
  %v82 = vadd.f32 0.0, %v81
  %v83 = vpop.f32.mrf.mxu0
  %v84 = vpop.f32.mrf.mxu0
  %v85 = vadd.f32 0.0, %v84
  %v86 = vpop.f32.mrf.mxu0
  %87 = vmatprep.mubr.bf16.mxu0 0
  %88 = vmatmul.mubr.bf16.gmra.mxu0 %v39
  %v89 = vpop.f32.mrf.mxu0
  %v90 = vadd.f32 0.0, %v89
  %v91 = vpop.f32.mrf.mxu0
  %v92 = vpop.f32.mrf.mxu0
  %v93 = vadd.f32 0.0, %v92
  %v94 = vpop.f32.mrf.mxu0
  %95 = vmatprep.mubr.bf16.mxu0 0
  %96 = vmatmul.mubr.bf16.gmra.mxu0 %v42
  %v97 = vpop.f32.mrf.mxu0
  %v98 = vadd.f32 0.0, %v97
  %v99 = vpop.f32.mrf.mxu0
  %v100 = vpop.f32.mrf.mxu0
  %v101 = vpop.f32.mrf.mxu0
  %102 = vdwg.mxu0
  %v103 = vld [vmem:[%s0] sm:$0xf]
  %v104 = vld [vmem:[%s0 + $0x4] sm:$0xf]
  %v105 = vld [vmem:[%s0 + $0x8] sm:$0xf]
  %v106 = vld [vmem:[%s0 + $0xc] sm:$0xf]
  %v107 = vld [vmem:[%s0 + $0x10] sm:$0x1]
  %v108 = vpack.c.bf16 %v85, %v82
  %v109 = vpack.c.bf16 %v93, %v90
  %v110 = vpack.c.bf16 %v98, %v98
  %v116 = vunpack.c.l.b16 %v103
  %v117 = vunpack.c.l.b16 %v104
  %v118 = vunpack.c.l.b16 %v105
  %v119 = vunpack.c.l.b16 %v106
  %v120 = vunpack.c.l.b16 %v107
  %v121 = vpack.c.b16 %v117, %v116
  %v122 = vpack.c.b16 %v119, %v118
  %v123 = vpack.c.b16 %v120, %v120
  %vm124 = vcmask 277504
  %v126 = vsel %vm124, %v121, 0
  %v129 = vsel %vm124, %v122, 0
  %v132 = vsel %vm124, %v123, 0
  %vm134 = vcmask 1040384
  %v136 = vsel %vm134, %v110, 0
  %138 = vmatprep.subr.bf16.mxu0 0
  %139 = vmatpush1.bf16.msra.mxu0 0
  %140 = vmatprep.subr.bf16.mxu0 0
  %141 = vmatpush1.bf16.msra.mxu0 0
  %142 = vmatprep.subr.bf16.mxu0 0
  %143 = vmatpush1.bf16.msra.mxu0 0
  %144 = vmatprep.subr.bf16.mxu0 0
  %145 = vmatpush1.bf16.msra.mxu0 0
  %146 = vmatprep.subr.bf16.mxu0 0
  %147 = vmatpush1.bf16.msra.mxu0 0
  %148 = vmatprep.subr.bf16.mxu0 0
  %149 = vmatpush1.bf16.msra.mxu0 %v136
  %150 = vmatprep.subr.bf16.mxu0 0
  %151 = vmatpush1.bf16.msra.mxu0 %v109
  %152 = vmatprep.subr.bf16.mxu0 0
  %153 = vmatpush1.bf16.msra.mxu0 %v108
  %154 = vmatprep.subr.bf16.mxu0 0
  %155 = vmatpush2.bf16.msra.mxu0 0
  %156 = vmatprep.subr.bf16.mxu0 0
  %157 = vmatpush2.bf16.msra.mxu0 0
  %158 = vmatprep.subr.bf16.mxu0 0
  %159 = vmatpush2.bf16.msra.mxu0 0
  %160 = vmatprep.subr.bf16.mxu0 0
  %161 = vmatpush2.bf16.msra.mxu0 0
  %162 = vmatprep.subr.bf16.mxu0 0
  %163 = vmatpush2.bf16.msra.mxu0 0
  %164 = vmatprep.subr.bf16.mxu0 0
  %165 = vmatpush2.bf16.msra.mxu0 0
  %166 = vmatprep.subr.bf16.mxu0 0
  %167 = vmatpush2.bf16.msra.mxu0 0
  %168 = vmatprep.subr.bf16.mxu0 0
  %169 = vmatpush2.bf16.msra.mxu0 0
  %170 = vmatprep.mubr.bf16.mxu0 0
  %171 = vmatmul.mubr.bf16.gmra.mxu0 %v126
  %v172 = vpop.f32.mrf.mxu0
  %v173 = vadd.f32 0.0, %v172
  %v174 = vpop.f32.mrf.mxu0
  %v175 = vpop.f32.mrf.mxu0
  %v176 = vadd.f32 0.0, %v175
  %v177 = vpop.f32.mrf.mxu0
  %178 = vmatprep.mubr.bf16.mxu0 0
  %179 = vmatmul.mubr.bf16.gmra.mxu0 %v129
  %v180 = vpop.f32.mrf.mxu0
  %v181 = vadd.f32 0.0, %v180
  %v182 = vpop.f32.mrf.mxu0
  %v183 = vpop.f32.mrf.mxu0
  %v184 = vadd.f32 0.0, %v183
  %v185 = vpop.f32.mrf.mxu0
  %186 = vmatprep.mubr.bf16.mxu0 0
  %187 = vmatmul.mubr.bf16.gmra.mxu0 %v132
  %v188 = vpop.f32.mrf.mxu0
  %v189 = vadd.f32 0.0, %v188
  %v190 = vpop.f32.mrf.mxu0
  %v191 = vpop.f32.mrf.mxu0
  %v192 = vpop.f32.mrf.mxu0
  %193 = vdwg.mxu0
  %vm194 = vcmask 15360
  %195 = vst.msk [vmem:[%s3] sm:$0xff] %vm194, %v173
  %196 = vst.msk [vmem:[%s3 + $0x8] sm:$0xff] %vm194, %v176
  %197 = vst.msk [vmem:[%s3 + $0x10] sm:$0xff] %vm194, %v181
  %198 = vst.msk [vmem:[%s3 + $0x18] sm:$0xff] %vm194, %v184
  %vm199 = vcmask 9216
  %200 = vst.msk [vmem:[%s3 + $0x20] sm:$0x3] %vm199, %v189
  // Predicated region
  $region14: #{tpu_custom_call.1} parent=0 // pred_check
    _
  $region15: #{tpu_custom_call.1} parent=0 // pred_check_branch
    %202 = sbr.rel (0) target = $region17
  $region16: #{tpu_custom_call.1} parent=0 // pred_region
    _
  $region17: #{tpu_custom_call.1} parent=0 // pred_fallthru
    _
  // Predicated region
  $region18: #{tpu_custom_call.1} parent=0 // pred_check
    _
  $region19: #{tpu_custom_call.1} parent=0 // pred_check_branch
    %204 = sbr.rel (0) target = $region21
  $region20: #{tpu_custom_call.1} parent=0 // pred_region
    _
  $region21: #{tpu_custom_call.1} parent=0 // pred_fallthru
    _

</llo_original>
